<compile_context>
chip_gen: v7x
topology: tpu7x:2x2x1
jax: 0.10.0
libtpu: 0.0.40
codegen_flags: <defaults>
</compile_context>

<pallas_src>
import math

import jax
import jax.numpy as jnp
from jax.experimental import pallas as pl
from jax.experimental.pallas import tpu as pltpu


def _round_up(x, m):
    return ((x + m - 1) // m) * m


def _lora_linear_kernel(x_ref, w_ref, b_ref, xa_ref, bb_ref, o_ref, acc_ref):
    """One (tm, tn) output tile, accumulated over the K grid axis.

    x_ref  : (tm, tk)  compute-dtype  activation tile
    w_ref  : (tk, tn)  compute-dtype  weight tile, stored (K, N)
    b_ref  : (1,  tn)  f32            bias tile
    xa_ref : (tm, rp)  compute-dtype  precomputed x @ A tile (rank padded)
    bb_ref : (rp, tn)  compute-dtype  LoRA-B tile, pre-scaled by alpha
    o_ref  : (tm, tn)                 output tile
    acc_ref: (tm, tn)  f32            base-matmul accumulator (VMEM scratch)
    """
    k = pl.program_id(2)

    @pl.when(k == 0)
    def _init():
        acc_ref[...] = jnp.zeros_like(acc_ref)

    # Base path: plain (tm, tk) @ (tk, tn). W is already (K, N), so no
    # per-tile transpose is needed.
    acc_ref[...] += jnp.dot(x_ref[...], w_ref[...],
                            preferred_element_type=jnp.float32)

    @pl.when(k == pl.num_programs(2) - 1)
    def _finalize():
        # LoRA correction: x @ A was precomputed once in the wrapper, alpha is
        # folded into bb_ref, so only one tiny matmul remains here.
        lora = jnp.dot(xa_ref[...], bb_ref[...],
                       preferred_element_type=jnp.float32)
        o_ref[...] = (acc_ref[...] + b_ref[...] + lora).astype(o_ref.dtype)


def prepare_lora_params(W, b, A, B, alpha, *, tn=1024, tk=1024,
                        compute_dtype=jnp.bfloat16):
    """One-time weight preparation: transpose/pad/cast W, A, fold alpha into B.

    Do this at parameter-load time, not per forward call, so the per-call HBM
    traffic is only the activations + one streaming pass over the weights.
    """
    N, K = W.shape
    rank = A.shape[1]

    tn = min(tn, _round_up(N, 128))
    tk = min(tk, _round_up(K, 128))
    rp = _round_up(max(rank, 128), 128)          # lane-dense LoRA rank
    Np, Kp = _round_up(N, tn), _round_up(K, tk)

    Wt = jnp.pad(W.T, ((0, Kp - K), (0, Np - N))).astype(compute_dtype)   # (Kp, Np)
    bp = jnp.pad(b.astype(jnp.float32).reshape(1, N), ((0, 0), (0, Np - N)))
    Ap = jnp.pad(A, ((0, Kp - K), (0, rp - rank))).astype(compute_dtype)  # (Kp, rp)
    Bs = jnp.pad(alpha * B, ((0, rp - rank), (0, Np - N))).astype(compute_dtype)

    return dict(Wt=Wt, bias=bp, A=Ap, B_scaled=Bs,
                N=N, K=K, Np=Np, Kp=Kp, tn=tn, tk=tk, rp=rp,
                compute_dtype=compute_dtype)


def linear_with_lora(x, params, *, tm=512, out_dtype=None,
                     vmem_limit_bytes=None):
    """y = x @ W^T + b + alpha * (x @ A @ B), using pre-prepared params."""
    *lead, K = x.shape
    assert K == params["K"], (K, params["K"])
    M = math.prod(lead) if lead else 1

    N, Np, Kp = params["N"], params["Np"], params["Kp"]
    tn, tk, rp = params["tn"], params["tk"], params["rp"]
    cdt = params["compute_dtype"]
    out_dtype = x.dtype if out_dtype is None else out_dtype

    # Clamp the M tile to the (8-aligned) problem so small shapes still work.
    tm = min(tm, _round_up(M, 8))
    Mp = _round_up(M, tm)

    x2d = jnp.pad(x.reshape(M, K), ((0, Mp - M), (0, Kp - K))).astype(cdt)

    # LoRA stage 1 precomputed once per call: M*K*rank FLOPs, negligible next
    # to the base M*K*N matmul, and it avoids recomputing x @ A per N tile.
    xa = jnp.dot(x2d, params["A"],
                 preferred_element_type=jnp.float32).astype(cdt)   # (Mp, rp)

    grid = (Mp // tm, Np // tn, Kp // tk)

    compiler_kwargs = dict(
        dimension_semantics=("parallel", "parallel", "arbitrary"))
    if vmem_limit_bytes is not None:
        compiler_kwargs["vmem_limit_bytes"] = vmem_limit_bytes

    out = pl.pallas_call(
        _lora_linear_kernel,
        out_shape=jax.ShapeDtypeStruct((Mp, Np), out_dtype),
        grid_spec=pltpu.PrefetchScalarGridSpec(
            num_scalar_prefetch=0,
            grid=grid,
            in_specs=[
                pl.BlockSpec((tm, tk), lambda i, j, k: (i, k)),   # x
                pl.BlockSpec((tk, tn), lambda i, j, k: (k, j)),   # W^T (K, N)
                pl.BlockSpec((1, tn), lambda i, j, k: (0, j)),    # bias
                pl.BlockSpec((tm, rp), lambda i, j, k: (i, 0)),   # x @ A
                pl.BlockSpec((rp, tn), lambda i, j, k: (0, j)),   # alpha * B
            ],
            out_specs=pl.BlockSpec((tm, tn), lambda i, j, k: (i, j)),
            scratch_shapes=[
                pltpu.VMEM((tm, tn), jnp.float32),   # base accumulator
            ]),
        compiler_params=pltpu.CompilerParams(**compiler_kwargs),
    )(x2d, params["Wt"], params["bias"], xa, params["B_scaled"])

    return out[:M, :N].reshape(*lead, N)


def init_params(key, in_features, out_features, rank):
    """Deterministic init mirroring the PyTorch module's __init__."""
    k_w, k_b, k_a = jax.random.split(key, 3)

    # nn.Linear: kaiming_uniform_(W, a=sqrt(5)) -> U(-bound, bound),
    # bound = sqrt(6 / ((1 + a^2) * fan_in)) = sqrt(1 / fan_in)
    w_bound = math.sqrt(1.0 / in_features)
    W = jax.random.uniform(k_w, (out_features, in_features),
                           minval=-w_bound, maxval=w_bound, dtype=jnp.float32)
    # nn.Linear bias: U(-1/sqrt(fan_in), 1/sqrt(fan_in))
    b_bound = 1.0 / math.sqrt(in_features)
    bias = jax.random.uniform(k_b, (out_features,),
                              minval=-b_bound, maxval=b_bound, dtype=jnp.float32)
    # LoRA A: kaiming_uniform_(A, a=sqrt(5)); torch's fan_in for an
    # (in_dim, rank) parameter is rank, so bound = sqrt(1 / rank)
    a_bound = math.sqrt(1.0 / rank)
    A = jax.random.uniform(k_a, (in_features, rank),
                           minval=-a_bound, maxval=a_bound, dtype=jnp.float32)
    # LoRA B: zeros (as in the module)
    B = jnp.zeros((rank, out_features), dtype=jnp.float32)
    return W, bias, A, B


if __name__ == "__main__":
    batch, seq = 2, 8
    in_features, out_features, rank = 32, 32, 4
    alpha = 2.0

    key = jax.random.PRNGKey(0)
    k_x, k_p, k_b = jax.random.split(key, 3)
    x = jax.random.normal(k_x, (batch, seq, in_features), dtype=jnp.float32)
    W, bias, A, B = init_params(k_p, in_features, out_features, rank)
    # The module initializes B to zeros (so LoRA contributes nothing at init);
    # use a nonzero B here so the numerical check actually exercises LoRA.
    B = 0.1 * jax.random.normal(k_b, (rank, out_features), dtype=jnp.float32)

    # One-time weight preparation (hoisted out of the per-call hot path).
    params = prepare_lora_params(W, bias, A, B, alpha)

    y = linear_with_lora(x, params)
    y = jax.block_until_ready(y)

    # Reference in plain f32 JAX.
    y_ref = x @ W.T + bias + alpha * ((x @ A) @ B)
    assert y.shape == (batch, seq, out_features)
    # bf16 MXU operands with f32 accumulation -> loosened tolerance vs f32 ref.
    max_err = float(jnp.max(jnp.abs(y - y_ref)))
    assert jnp.allclose(y, y_ref, atol=5e-2, rtol=5e-2), max_err

    print("KERNEL_OK")
</pallas_src>

<mosaic_0001>
module attributes {stable_mosaic.version = 11 : i64} {
  func.func @_lora_linear_kernel(%arg0: i32, %arg1: i32, %arg2: i32, %arg3: memref<16x128xbf16, #tpu.memory_space<vmem>>, %arg4: memref<128x128xbf16, #tpu.memory_space<vmem>>, %arg5: memref<1x128xf32, #tpu.memory_space<vmem>>, %arg6: memref<16x128xbf16, #tpu.memory_space<vmem>>, %arg7: memref<128x128xbf16, #tpu.memory_space<vmem>>, %arg8: memref<16x128xf32, #tpu.memory_space<vmem>>, %arg9: memref<16x128xf32, #tpu.memory_space<vmem>>) attributes {dimension_semantics = [#tpu.dimension_semantics<parallel>, #tpu.dimension_semantics<parallel>, #tpu.dimension_semantics<arbitrary>], iteration_bounds = array<i64: 1, 1, 1>, scalar_prefetch = 0 : i64, scratch_operands = 1 : i64, tpu.core_type = #tpu.core_type<tc>, window_params = [{transform_indices = @transform_0, window_bounds = array<i64: 16, 128>}, {transform_indices = @transform_1, window_bounds = array<i64: 128, 128>}, {transform_indices = @transform_2, window_bounds = array<i64: 1, 128>}, {transform_indices = @transform_3, window_bounds = array<i64: 16, 128>}, {transform_indices = @transform_4, window_bounds = array<i64: 128, 128>}, {transform_indices = @transform_5, window_bounds = array<i64: 16, 128>}]} {
    %c0_i32 = arith.constant 0 : i32
    %0 = arith.cmpi eq, %arg2, %c0_i32 : i32
    %1 = arith.extui %0 : i1 to i32
    %c0_i32_0 = arith.constant 0 : i32
    %2 = arith.cmpi ne, %1, %c0_i32_0 : i32
    scf.if %2 {
      %cst_10 = arith.constant 0.000000e+00 : f32
      %12 = vector.broadcast %cst_10 : f32 to vector<16x128xf32>
      %c0_11 = arith.constant 0 : index
      %c0_12 = arith.constant 0 : index
      %13 = vector.load %arg9[%c0_11, %c0_12] : memref<16x128xf32, #tpu.memory_space<vmem>>, vector<16x128xf32>
      tpu.vector_store %arg9[%c0_11, %c0_12], %12 {strides = array<i32>} : memref<16x128xf32, #tpu.memory_space<vmem>>, vector<16x128xf32>,
    } else {
    }
    %c0 = arith.constant 0 : index
    %c0_1 = arith.constant 0 : index
    %3 = vector.load %arg9[%c0, %c0_1] : memref<16x128xf32, #tpu.memory_space<vmem>>, vector<16x128xf32>
    %c0_2 = arith.constant 0 : index
    %c0_3 = arith.constant 0 : index
    %4 = vector.load %arg3[%c0_2, %c0_3] : memref<16x128xbf16, #tpu.memory_space<vmem>>, vector<16x128xbf16>
    %c0_4 = arith.constant 0 : index
    %c0_5 = arith.constant 0 : index
    %5 = vector.load %arg4[%c0_4, %c0_5] : memref<128x128xbf16, #tpu.memory_space<vmem>>, vector<128x128xbf16>
    %cst = arith.constant dense<0.000000e+00> : vector<16x128xf32>
    %6 = tpu.matmul %4, %5, %cst {dimension_numbers = #tpu.dot_dimension_numbers<[1], [0], [0], [1], [0, 0, 1, 1], [], []>} : vector<16x128xbf16>, vector<128x128xbf16>, vector<16x128xf32> -> vector<16x128xf32>
    %7 = arith.addf %3, %6 : vector<16x128xf32>
    %c0_6 = arith.constant 0 : index
    %c0_7 = arith.constant 0 : index
    %8 = vector.load %arg9[%c0_6, %c0_7] : memref<16x128xf32, #tpu.memory_space<vmem>>, vector<16x128xf32>
    tpu.vector_store %arg9[%c0_6, %c0_7], %7 {strides = array<i32>} : memref<16x128xf32, #tpu.memory_space<vmem>>, vector<16x128xf32>,
    %c0_i32_8 = arith.constant 0 : i32
    %9 = arith.cmpi eq, %arg2, %c0_i32_8 : i32
    %10 = arith.extui %9 : i1 to i32
    %c0_i32_9 = arith.constant 0 : i32
    %11 = arith.cmpi ne, %10, %c0_i32_9 : i32
    scf.if %11 {
      %c0_10 = arith.constant 0 : index
      %c0_11 = arith.constant 0 : index
      %12 = vector.load %arg6[%c0_10, %c0_11] : memref<16x128xbf16, #tpu.memory_space<vmem>>, vector<16x128xbf16>
      %c0_12 = arith.constant 0 : index
      %c0_13 = arith.constant 0 : index
      %13 = vector.load %arg7[%c0_12, %c0_13] : memref<128x128xbf16, #tpu.memory_space<vmem>>, vector<128x128xbf16>
      %cst_14 = arith.constant dense<0.000000e+00> : vector<16x128xf32>
      %14 = tpu.matmul %12, %13, %cst_14 {dimension_numbers = #tpu.dot_dimension_numbers<[1], [0], [0], [1], [0, 0, 1, 1], [], []>} : vector<16x128xbf16>, vector<128x128xbf16>, vector<16x128xf32> -> vector<16x128xf32>
      %c0_15 = arith.constant 0 : index
      %c0_16 = arith.constant 0 : index
      %15 = vector.load %arg9[%c0_15, %c0_16] : memref<16x128xf32, #tpu.memory_space<vmem>>, vector<16x128xf32>
      %c0_17 = arith.constant 0 : index
      %c0_18 = arith.constant 0 : index
      %16 = vector.load %arg5[%c0_17, %c0_18] : memref<1x128xf32, #tpu.memory_space<vmem>>, vector<1x128xf32>
      %17 = vector.broadcast %16 : vector<1x128xf32> to vector<16x128xf32>
      %18 = arith.addf %15, %17 : vector<16x128xf32>
      %19 = arith.addf %18, %14 : vector<16x128xf32>
      %c0_19 = arith.constant 0 : index
      %c0_20 = arith.constant 0 : index
      %20 = vector.load %arg8[%c0_19, %c0_20] : memref<16x128xf32, #tpu.memory_space<vmem>>, vector<16x128xf32>
      tpu.vector_store %arg8[%c0_19, %c0_20], %19 {strides = array<i32>} : memref<16x128xf32, #tpu.memory_space<vmem>>, vector<16x128xf32>,
    } else {
    }
    return
  }
  func.func @transform_0(%arg0: i32, %arg1: i32, %arg2: i32) -> (i32, i32) {
    %c0_i32 = arith.constant 0 : i32
    return %arg0, %arg2 : i32, i32
  }
  func.func @transform_1(%arg0: i32, %arg1: i32, %arg2: i32) -> (i32, i32) {
    %c0_i32 = arith.constant 0 : i32
    return %arg2, %arg1 : i32, i32
  }
  func.func @transform_2(%arg0: i32, %arg1: i32, %arg2: i32) -> (i32, i32) {
    %c0_i32 = arith.constant 0 : i32
    %c0_i32_0 = arith.constant 0 : i32
    return %c0_i32, %arg1 : i32, i32
  }
  func.func @transform_3(%arg0: i32, %arg1: i32, %arg2: i32) -> (i32, i32) {
    %c0_i32 = arith.constant 0 : i32
    %c0_i32_0 = arith.constant 0 : i32
    return %arg0, %c0_i32 : i32, i32
  }
  func.func @transform_4(%arg0: i32, %arg1: i32, %arg2: i32) -> (i32, i32) {
    %c0_i32 = arith.constant 0 : i32
    %c0_i32_0 = arith.constant 0 : i32
    return %c0_i32, %arg1 : i32, i32
  }
  func.func @transform_5(%arg0: i32, %arg1: i32, %arg2: i32) -> (i32, i32) {
    %c0_i32 = arith.constant 0 : i32
    return %arg0, %arg1 : i32, i32
  }
}

</mosaic_0001>

<llo_original>
// kernel: tpu_custom_call.1
$region0: #{tpu_custom_call.1}
  #allocation0 [shape = 'u32[]', space=smem, size = 0x4, offset = 0x4, fixed_abs, tag = 'smem constant byte address 0x4 - core index']
  #allocation1 [shape = 'u32[144,128]{1,0:T(1,128)}', space=vmem, size = 0x12000, scoped, tag = 'internal scratch']
  #allocation2 [shape = 'f32[16,128]{1,0:T(8,128)}', space=vmem, size = 0x2000, scoped, tag = 'scratch operand']
  %s0 = inlined_call_operand.hbm [shape: bf16[16,128], index: 0, kind: input, shape index: {}]
  %s1 = inlined_call_operand.hbm [shape: bf16[128,128], index: 1, kind: input, shape index: {}]
  %s2 = inlined_call_operand.vmem [shape: f32[1,128], index: 2, kind: input, shape index: {}]
  %s3 = inlined_call_operand.vmem [shape: bf16[16,128], index: 3, kind: input, shape index: {}]
  %s4 = inlined_call_operand.hbm [shape: bf16[128,128], index: 4, kind: input, shape index: {}]
  %s5 = inlined_call_operand.hbm [shape: f32[16,128], index: 5, kind: output, shape index: {}]
  %s6 = sld [smem:[#allocation0]]
  $region50: #{tpu_custom_call.1} parent=0
    _
  %s8 = ssub.s32 1, %s6
  %s9 = scalar_select 0, %s8, %s6
  $region1: #{tpu_custom_call.1} parent=0
    #allocation3 [shape = 'u8[4096]{0}', space=vmem, size = 0x1000, scoped, tag = 'input window, operand 0, single buffered']
    #allocation4 [shape = 's32[1]{0}', space=sflag, size = 0x4, scoped, tag = 'scoped memory for tpu_custom_call.1']
    #allocation5 [shape = 's32[1]{0}', space=sflag, size = 0x4, scoped, tag = 'scoped memory for tpu_custom_call.1']
    #allocation6 [shape = 'u8[32768]{0}', space=vmem, size = 0x8000, scoped, tag = 'input window, operand 1, single buffered']
    #allocation7 [shape = 's32[1]{0}', space=sflag, size = 0x4, scoped, tag = 'scoped memory for tpu_custom_call.1']
    #allocation8 [shape = 'u8[32768]{0}', space=vmem, size = 0x8000, scoped, tag = 'input window, operand 4, single buffered']
    #allocation9 [shape = 'u8[8192]{0}', space=vmem, size = 0x2000, scoped, tag = 'output window, operand 0, single buffered']
    %10 = vsyncpa [#allocation4], 0
    %11 = vsyncpa [#allocation7], 0
    %12 = vsyncpa [#allocation5], 0
    // Predicated region
    $region2: #{tpu_custom_call.1} parent=1 // pred_check
      _
    $region3: #{tpu_custom_call.1} parent=1 // pred_check_branch
      %14 = sbr.rel (0) target = $region5
    $region4: #{tpu_custom_call.1} parent=1 // pred_region
      %s16 = ssub.s32 128, 128
      %17 = vsyncadd [#allocation4], %s16
      %s18 = sshll.u32 [#allocation3], 4
      %s19 = int_to_ptr.vmem [resolvable:$true] %s18
      %24 = dma.hbm_to_vmem [thread:$0]  %s0, 128, %s19, [#allocation4], 64, 64, 4
    $region5: #{tpu_custom_call.1} parent=1 // pred_fallthru
      _
    // Predicated region
    $region6: #{tpu_custom_call.1} parent=1 // pred_check
      _
    $region7: #{tpu_custom_call.1} parent=1 // pred_check_branch
      %26 = sbr.rel (0) target = $region9
    $region8: #{tpu_custom_call.1} parent=1 // pred_region
      %s28 = ssub.s32 1024, 1024
      %29 = vsyncadd [#allocation7], %s28
      %s30 = sshll.u32 [#allocation6], 4
      %s31 = int_to_ptr.vmem [resolvable:$true] %s30
      %36 = dma.hbm_to_vmem [thread:$0]  %s1, 1024, %s31, [#allocation7], 64, 64, 4
    $region9: #{tpu_custom_call.1} parent=1 // pred_fallthru
      _
    // Predicated region
    $region10: #{tpu_custom_call.1} parent=1 // pred_check
      _
    $region11: #{tpu_custom_call.1} parent=1 // pred_check_branch
      %38 = sbr.rel (0) target = $region13
    $region12: #{tpu_custom_call.1} parent=1 // pred_region
      _
    $region13: #{tpu_custom_call.1} parent=1 // pred_fallthru
      _
    // Predicated region
    $region14: #{tpu_custom_call.1} parent=1 // pred_check
      _
    $region15: #{tpu_custom_call.1} parent=1 // pred_check_branch
      %40 = sbr.rel (0) target = $region17
    $region16: #{tpu_custom_call.1} parent=1 // pred_region
      _
    $region17: #{tpu_custom_call.1} parent=1 // pred_fallthru
      _
    // Predicated region
    $region18: #{tpu_custom_call.1} parent=1 // pred_check
      _
    $region19: #{tpu_custom_call.1} parent=1 // pred_check_branch
      %42 = sbr.rel (0) target = $region21
    $region20: #{tpu_custom_call.1} parent=1 // pred_region
      %s44 = ssub.s32 1024, 1024
      %45 = vsyncadd [#allocation7], %s44
      %s46 = sshll.u32 [#allocation8], 4
      %s47 = int_to_ptr.vmem [resolvable:$true] %s46
      %52 = dma.hbm_to_vmem [thread:$0]  %s4, 1024, %s47, [#allocation7], 64, 64, 4
    $region21: #{tpu_custom_call.1} parent=1 // pred_fallthru
      _
    // Predicated region
    $region22: #{tpu_custom_call.1} parent=1 // pred_check
      _
    $region23: #{tpu_custom_call.1} parent=1 // pred_check_branch
      %54 = sbr.rel (0) target = $region25
    $region24: #{tpu_custom_call.1} parent=1 // pred_region
      %55 = dma.done [#allocation4], 128
    $region25: #{tpu_custom_call.1} parent=1 // pred_fallthru
      _
    // Predicated region
    $region26: #{tpu_custom_call.1} parent=1 // pred_check
      _
    $region27: #{tpu_custom_call.1} parent=1 // pred_check_branch
      %57 = sbr.rel (0) target = $region29
    $region28: #{tpu_custom_call.1} parent=1 // pred_region
      %58 = dma.done [#allocation7], 1024
    $region29: #{tpu_custom_call.1} parent=1 // pred_fallthru
      _
    // Predicated region
    $region30: #{tpu_custom_call.1} parent=1 // pred_check
      _
    $region31: #{tpu_custom_call.1} parent=1 // pred_check_branch
      %60 = sbr.rel (0) target = $region33
    $region32: #{tpu_custom_call.1} parent=1 // pred_region
      %61 = dma.done [#allocation7], 1024
    $region33: #{tpu_custom_call.1} parent=1 // pred_fallthru
      _
    %p63 = scmp.eq.s32.totalorder 0, 0
    // Predicated region
    $region34: #{tpu_custom_call.1} parent=1 // pred_check
      %p64 = pneg %p63
    $region35: #{tpu_custom_call.1} parent=1 // pred_check_branch
      %66 = sbr.rel (%p64) target = $region37
    $region36: #{tpu_custom_call.1} parent=1 // pred_region
      %67 = vst [vmem:[#allocation2] sm:$0xff] 0.0
      %68 = vst [vmem:[#allocation2 + $0x8] sm:$0xff] 0.0
    $region37: #{tpu_custom_call.1} parent=1 // pred_fallthru
      _
    %v69 = vld [vmem:[#allocation2] sm:$0xff]
    %v70 = vld [vmem:[#allocation2 + $0x8] sm:$0xff]
    %v71 = vld [vmem:[#allocation3] sm:$0xf]
    %v72 = vld [vmem:[#allocation3 + $0x4] sm:$0xf]
    %v73 = vld [vmem:[#allocation6] sm:$0xf]
    %v74 = vld [vmem:[#allocation6 + $0x4] sm:$0xf]
    %v75 = vld [vmem:[#allocation6 + $0x8] sm:$0xf]
    %v76 = vld [vmem:[#allocation6 + $0xc] sm:$0xf]
    %v77 = vld [vmem:[#allocation6 + $0x10] sm:$0xf]
    %v78 = vld [vmem:[#allocation6 + $0x14] sm:$0xf]
    %v79 = vld [vmem:[#allocation6 + $0x18] sm:$0xf]
    %v80 = vld [vmem:[#allocation6 + $0x1c] sm:$0xf]
    %v81 = vld [vmem:[#allocation6 + $0x20] sm:$0xf]
    %v82 = vld [vmem:[#allocation6 + $0x24] sm:$0xf]
    %v83 = vld [vmem:[#allocation6 + $0x28] sm:$0xf]
    %v84 = vld [vmem:[#allocation6 + $0x2c] sm:$0xf]
    %v85 = vld [vmem:[#allocation6 + $0x30] sm:$0xf]
    %v86 = vld [vmem:[#allocation6 + $0x34] sm:$0xf]
    %v87 = vld [vmem:[#allocation6 + $0x38] sm:$0xf]
    %v88 = vld [vmem:[#allocation6 + $0x3c] sm:$0xf]
    %v91 = vunpack.c.l.b16 %v71
    %v92 = vunpack.c.l.b16 %v72
    %v93 = vpack.c.b16 %v92, %v91
    %v111 = vunpack.c.l.b16 %v73
    %v112 = vunpack.c.l.b16 %v74
    %v113 = vunpack.c.l.b16 %v75
    %v114 = vunpack.c.l.b16 %v76
    %v115 = vunpack.c.l.b16 %v77
    %v116 = vunpack.c.l.b16 %v78
    %v117 = vunpack.c.l.b16 %v79
    %v118 = vunpack.c.l.b16 %v80
    %v119 = vunpack.c.l.b16 %v81
    %v120 = vunpack.c.l.b16 %v82
    %v121 = vunpack.c.l.b16 %v83
    %v122 = vunpack.c.l.b16 %v84
    %v123 = vunpack.c.l.b16 %v85
    %v124 = vunpack.c.l.b16 %v86
    %v125 = vunpack.c.l.b16 %v87
    %v126 = vunpack.c.l.b16 %v88
    %v127 = vpack.c.b16 %v112, %v111
    %v128 = vpack.c.b16 %v114, %v113
    %v129 = vpack.c.b16 %v116, %v115
    %v130 = vpack.c.b16 %v118, %v117
    %v131 = vpack.c.b16 %v120, %v119
    %v132 = vpack.c.b16 %v122, %v121
    %v133 = vpack.c.b16 %v124, %v123
    %v134 = vpack.c.b16 %v126, %v125
    %143 = vmatprep.subr.bf16.mxu0 0
    %144 = vmatpush1.bf16.msra.mxu0 %v127
    %145 = vmatprep.subr.bf16.mxu0 0
    %146 = vmatpush1.bf16.msra.mxu0 %v128
    %147 = vmatprep.subr.bf16.mxu0 0
    %148 = vmatpush1.bf16.msra.mxu0 %v129
    %149 = vmatprep.subr.bf16.mxu0 0
    %150 = vmatpush1.bf16.msra.mxu0 %v130
    %151 = vmatprep.subr.bf16.mxu0 0
    %152 = vmatpush1.bf16.msra.mxu0 %v131
    %153 = vmatprep.subr.bf16.mxu0 0
    %154 = vmatpush1.bf16.msra.mxu0 %v132
    %155 = vmatprep.subr.bf16.mxu0 0
    %156 = vmatpush1.bf16.msra.mxu0 %v133
    %157 = vmatprep.subr.bf16.mxu0 0
    %158 = vmatpush1.bf16.msra.mxu0 %v134
    %159 = vmatprep.subr.bf16.mxu0 0
    %160 = vmatpush1.bf16.msra.mxu0 0
    %161 = vmatprep.subr.bf16.mxu0 0
    %162 = vmatpush1.bf16.msra.mxu0 0
    %163 = vmatprep.subr.bf16.mxu0 0
    %164 = vmatpush1.bf16.msra.mxu0 0
    %165 = vmatprep.subr.bf16.mxu0 0
    %166 = vmatpush1.bf16.msra.mxu0 0
    %167 = vmatprep.subr.bf16.mxu0 0
    %168 = vmatpush1.bf16.msra.mxu0 0
    %169 = vmatprep.subr.bf16.mxu0 0
    %170 = vmatpush1.bf16.msra.mxu0 0
    %171 = vmatprep.subr.bf16.mxu0 0
    %172 = vmatpush1.bf16.msra.mxu0 0
    %173 = vmatprep.subr.bf16.mxu0 0
    %174 = vmatpush1.bf16.msra.mxu0 0
    %175 = vmatprep.mubr.bf16.mxu0 0
    %176 = vmatmul.mubr.bf16.gmra.mrb[0].mxu0 %v93
    %v177 = vpop.f32.mrb[0].mxu0
    %v178 = vadd.f32 0.0, %v177
    %v179 = vpop.f32.mrb[0].mxu0
    %v180 = vpop.f32.mrb[0].mxu0
    %v181 = vadd.f32 0.0, %v180
    %v182 = vpop.f32.mrb[0].mxu0
    %183 = vdwg.mxu0
    %v184 = vadd.f32 %v69, %v178
    %v185 = vadd.f32 %v70, %v181
    %186 = vst [vmem:[#allocation2] sm:$0xff] %v184
    %187 = vst [vmem:[#allocation2 + $0x8] sm:$0xff] %v185
    // Predicated region
    $region38: #{tpu_custom_call.1} parent=1 // pred_check
      %p188 = pneg %p63
    $region39: #{tpu_custom_call.1} parent=1 // pred_check_branch
      %190 = sbr.rel (%p188) target = $region41
    $region40: #{tpu_custom_call.1} parent=1 // pred_region
      %v191 = vld [vmem:[%s3] sm:$0xf]
      %v192 = vld [vmem:[%s3 + $0x4] sm:$0xf]
      %v193 = vld [vmem:[#allocation8] sm:$0xf]
      %v194 = vld [vmem:[#allocation8 + $0x4] sm:$0xf]
      %v195 = vld [vmem:[#allocation8 + $0x8] sm:$0xf]
      %v196 = vld [vmem:[#allocation8 + $0xc] sm:$0xf]
      %v197 = vld [vmem:[#allocation8 + $0x10] sm:$0xf]
      %v198 = vld [vmem:[#allocation8 + $0x14] sm:$0xf]
      %v199 = vld [vmem:[#allocation8 + $0x18] sm:$0xf]
      %v200 = vld [vmem:[#allocation8 + $0x1c] sm:$0xf]
      %v201 = vld [vmem:[#allocation8 + $0x20] sm:$0xf]
      %v202 = vld [vmem:[#allocation8 + $0x24] sm:$0xf]
      %v203 = vld [vmem:[#allocation8 + $0x28] sm:$0xf]
      %v204 = vld [vmem:[#allocation8 + $0x2c] sm:$0xf]
      %v205 = vld [vmem:[#allocation8 + $0x30] sm:$0xf]
      %v206 = vld [vmem:[#allocation8 + $0x34] sm:$0xf]
      %v207 = vld [vmem:[#allocation8 + $0x38] sm:$0xf]
      %v208 = vld [vmem:[#allocation8 + $0x3c] sm:$0xf]
      %v211 = vunpack.c.l.b16 %v191
      %v212 = vunpack.c.l.b16 %v192
      %v213 = vpack.c.b16 %v212, %v211
      %v231 = vunpack.c.l.b16 %v193
      %v232 = vunpack.c.l.b16 %v194
      %v233 = vunpack.c.l.b16 %v195
      %v234 = vunpack.c.l.b16 %v196
      %v235 = vunpack.c.l.b16 %v197
      %v236 = vunpack.c.l.b16 %v198
      %v237 = vunpack.c.l.b16 %v199
      %v238 = vunpack.c.l.b16 %v200
      %v239 = vunpack.c.l.b16 %v201
      %v240 = vunpack.c.l.b16 %v202
      %v241 = vunpack.c.l.b16 %v203
      %v242 = vunpack.c.l.b16 %v204
      %v243 = vunpack.c.l.b16 %v205
      %v244 = vunpack.c.l.b16 %v206
      %v245 = vunpack.c.l.b16 %v207
      %v246 = vunpack.c.l.b16 %v208
      %v247 = vpack.c.b16 %v232, %v231
      %v248 = vpack.c.b16 %v234, %v233
      %v249 = vpack.c.b16 %v236, %v235
      %v250 = vpack.c.b16 %v238, %v237
      %v251 = vpack.c.b16 %v240, %v239
      %v252 = vpack.c.b16 %v242, %v241
      %v253 = vpack.c.b16 %v244, %v243
      %v254 = vpack.c.b16 %v246, %v245
      %263 = vmatprep.subr.bf16.mxu0 0
      %264 = vmatpush1.bf16.msra.mxu0 %v247
      %265 = vmatprep.subr.bf16.mxu0 0
      %266 = vmatpush1.bf16.msra.mxu0 %v248
      %267 = vmatprep.subr.bf16.mxu0 0
      %268 = vmatpush1.bf16.msra.mxu0 %v249
      %269 = vmatprep.subr.bf16.mxu0 0
      %270 = vmatpush1.bf16.msra.mxu0 %v250
      %271 = vmatprep.subr.bf16.mxu0 0
      %272 = vmatpush1.bf16.msra.mxu0 %v251
      %273 = vmatprep.subr.bf16.mxu0 0
      %274 = vmatpush1.bf16.msra.mxu0 %v252
      %275 = vmatprep.subr.bf16.mxu0 0
      %276 = vmatpush1.bf16.msra.mxu0 %v253
      %277 = vmatprep.subr.bf16.mxu0 0
      %278 = vmatpush1.bf16.msra.mxu0 %v254
      %279 = vmatprep.subr.bf16.mxu0 0
      %280 = vmatpush1.bf16.msra.mxu0 0
      %281 = vmatprep.subr.bf16.mxu0 0
      %282 = vmatpush1.bf16.msra.mxu0 0
      %283 = vmatprep.subr.bf16.mxu0 0
      %284 = vmatpush1.bf16.msra.mxu0 0
      %285 = vmatprep.subr.bf16.mxu0 0
      %286 = vmatpush1.bf16.msra.mxu0 0
      %287 = vmatprep.subr.bf16.mxu0 0
      %288 = vmatpush1.bf16.msra.mxu0 0
      %289 = vmatprep.subr.bf16.mxu0 0
      %290 = vmatpush1.bf16.msra.mxu0 0
      %291 = vmatprep.subr.bf16.mxu0 0
      %292 = vmatpush1.bf16.msra.mxu0 0
      %293 = vmatprep.subr.bf16.mxu0 0
      %294 = vmatpush1.bf16.msra.mxu0 0
      %295 = vmatprep.mubr.bf16.mxu0 0
      %296 = vmatmul.mubr.bf16.gmra.mrb[0].mxu0 %v213
      %v297 = vpop.f32.mrb[0].mxu0
      %v298 = vadd.f32 0.0, %v297
      %v299 = vpop.f32.mrb[0].mxu0
      %v300 = vpop.f32.mrb[0].mxu0
      %v301 = vadd.f32 0.0, %v300
      %v302 = vpop.f32.mrb[0].mxu0
      %303 = vdwg.mxu0
      %v304 = vld [vmem:[#allocation2] sm:$0xff]
      %v305 = vld [vmem:[#allocation2 + $0x8] sm:$0xff]
      %v306 = vld [vmem:[%s2] sm:$0x1]
      %v308 = vlaneseq
      %v309 = vshrl.u32 %v308, 7
      %v310 = vsub.s32 0, %v309
      %v311 = vrot.slane %v306, %v310
      %v313 = vadd.f32 %v304, %v311
      %v314 = vadd.f32 %v305, %v311
      %v315 = vadd.f32 %v313, %v298
      %v316 = vadd.f32 %v314, %v301
      %317 = vst [vmem:[#allocation9] sm:$0xff] %v315
      %318 = vst [vmem:[#allocation9 + $0x8] sm:$0xff] %v316
    $region41: #{tpu_custom_call.1} parent=1 // pred_fallthru
      _
    // Predicated region
    $region42: #{tpu_custom_call.1} parent=1 // pred_check
      _
    $region43: #{tpu_custom_call.1} parent=1 // pred_check_branch
      %320 = sbr.rel (0) target = $region45
    $region44: #{tpu_custom_call.1} parent=1 // pred_region
      %s322 = ssub.s32 256, 256
      %323 = vsyncadd [#allocation5], %s322
      %s324 = sshll.u32 [#allocation9], 4
      %s325 = int_to_ptr.vmem [resolvable:$true] %s324
      %330 = dma.vmem_to_hbm [thread:$0]  %s325, 256, %s5, [#allocation5], 128, 128, 8
    $region45: #{tpu_custom_call.1} parent=1 // pred_fallthru
      _
    // Predicated region
    $region46: #{tpu_custom_call.1} parent=1 // pred_check
      _
    $region47: #{tpu_custom_call.1} parent=1 // pred_check_branch
      %332 = sbr.rel (0) target = $region49
    $region48: #{tpu_custom_call.1} parent=1 // pred_region
      %333 = dma.done [#allocation5], 256
    $region49: #{tpu_custom_call.1} parent=1 // pred_fallthru
      _
    %334 = vsyncpa [#allocation4], 1
    %335 = vsyncpa [#allocation7], 1
    %336 = vsyncpa [#allocation5], 1

</llo_original>
